<compile_context>
chip_gen: v7x
topology: tpu7x:2x2x1
jax: 0.10.0
libtpu: 0.0.40
codegen_flags: <defaults>
</compile_context>

<pallas_src>
import jax
import jax.numpy as jnp
from jax.experimental import pallas as pl
from jax.experimental.pallas import tpu as pltpu


def linear_kernel(x_ref, w_ref, b_ref, o_ref):
    # x_ref: (TM, 784)  w_ref: (784, 3)  b_ref: (1, 3)  o_ref: (TM, 3)
    acc = jnp.dot(x_ref[...], w_ref[...], preferred_element_type=jnp.float32)
    o_ref[...] = (acc + b_ref[...].astype(jnp.float32)).astype(o_ref.dtype)


def prepare_params(weight, bias):
    """One-time parameter prep (hoisted out of the forward hot path).

    weight: (D_out, D_in)  PyTorch nn.Linear layout  -> (D_in, D_out)
    bias:   (D_out,)                                 -> (1, D_out)
    """
    return weight.T, bias.reshape(1, -1)


def _choose_tm(batch, tm):
    """Pick a batch tile: large (HBM roofline), multiple of 8, >= 2 grid steps."""
    if tm is None:
        tm = 2048                       # big tiles amortize ~0.35 us/step overhead
    tm = min(tm, batch)
    tm = max(8, (tm // 8) * 8)          # f32 sublane multiple
    # Ensure at least 2 grid steps so both v7x TensorCores get work
    # (harmless extra step on single-TC v5e/v6e).
    if tm >= batch and batch > 8:
        half = (batch + 1) // 2
        tm = ((half + 7) // 8) * 8
    return tm


def _vmem_limit_bytes(tm, d_in, d_out, itemsize=4):
    """Right-sized scoped-VMEM request for this tiling (with headroom)."""
    lane, sub = 128, 8
    din_p = -(-d_in // lane) * lane
    dout_p = -(-d_out // lane) * lane
    x_bytes = 2 * tm * din_p * itemsize                 # double-buffered x tiles
    o_bytes = 2 * tm * dout_p * itemsize                # double-buffered out tiles
    w_bytes = (-(-d_in // sub) * sub) * dout_p * itemsize   # resident W (1 buffer)
    b_bytes = sub * dout_p * itemsize                   # resident bias
    need = x_bytes + o_bytes + w_bytes + b_bytes
    limit = int(need * 1.25) + (4 << 20)                # 25% + 4 MiB headroom
    return max(8 << 20, min(limit, 64 << 20))


def one_layer_network(x, w_t, b2d, *, tm=None):
    """Forward pass: x @ w_t + b2d  (== PyTorch nn.Linear semantics).

    x:   (B, D_in)      float32
    w_t: (D_in, D_out)  pre-transposed weight (from prepare_params)
    b2d: (1, D_out)     bias reshaped to 2-D (from prepare_params)
    returns (B, D_out)  float32
    """
    B, D_in = x.shape
    D_out = w_t.shape[1]

    tm = _choose_tm(B, tm)
    n_blocks = pl.cdiv(B, tm)   # ragged trailing block handled (masked) by Pallas

    return pl.pallas_call(
        linear_kernel,
        out_shape=jax.ShapeDtypeStruct((B, D_out), x.dtype),
        grid_spec=pltpu.PrefetchScalarGridSpec(
            num_scalar_prefetch=0,
            grid=(n_blocks,),
            in_specs=[
                # x: streamed, double-buffered by the BlockSpec pipeline.
                pl.BlockSpec((tm, D_in), lambda i: (i, 0)),
                # W / bias: resident across the grid -> single-buffered.
                pl.BlockSpec((D_in, D_out), lambda i: (0, 0),
                             pipeline_mode=pl.Buffered(1)),
                pl.BlockSpec((1, D_out), lambda i: (0, 0),
                             pipeline_mode=pl.Buffered(1)),
            ],
            out_specs=pl.BlockSpec((tm, D_out), lambda i: (i, 0)),
        ),
        compiler_params=pltpu.CompilerParams(
            dimension_semantics=("parallel",),   # shard batch axis over TCs
            vmem_limit_bytes=_vmem_limit_bytes(tm, D_in, D_out),
        ),
    )(x, w_t, b2d)


if __name__ == "__main__":
    key = jax.random.PRNGKey(0)
    kx, kw, kb = jax.random.split(key, 3)

    # B=200 exercises both the ">= 2 grid steps" split (tm=104, grid=2) and the
    # masked ragged trailing block (no wrapper-side pad/slice anymore).
    B, D_in, D_out = 200, 784, 3

    # Deterministic parameter init, mimicking PyTorch's nn.Linear default
    # (uniform in +/- 1/sqrt(fan_in)).
    bound = 1.0 / (D_in ** 0.5)
    weight = jax.random.uniform(kw, (D_out, D_in), jnp.float32, -bound, bound)
    bias = jax.random.uniform(kb, (D_out,), jnp.float32, -bound, bound)

    x = jax.random.normal(kx, (B, D_in), jnp.float32)

    # Parameters are prepared once (transpose/reshape hoisted off the hot path).
    w_t, b2d = prepare_params(weight, bias)

    out = one_layer_network(x, w_t, b2d)
    jax.block_until_ready(out)

    # Sanity check against plain JAX reference (PyTorch nn.Linear semantics).
    ref = x @ weight.T + bias
    assert out.shape == (B, D_out)
    assert jnp.allclose(out, ref, atol=1e-4, rtol=1e-4)

    print("KERNEL_OK")
</pallas_src>

<mosaic_0001>
module attributes {stable_mosaic.version = 11 : i64} {
  func.func @linear_kernel(%arg0: i32, %arg1: memref<104x784xf32, #tpu.memory_space<vmem>>, %arg2: memref<784x3xf32, #tpu.memory_space<vmem>>, %arg3: memref<1x3xf32, #tpu.memory_space<vmem>>, %arg4: memref<104x3xf32, #tpu.memory_space<vmem>>) attributes {dimension_semantics = [#tpu.dimension_semantics<parallel>], iteration_bounds = array<i64: 2>, scalar_prefetch = 0 : i64, scratch_operands = 0 : i64, tpu.core_type = #tpu.core_type<tc>, window_params = [{transform_indices = @transform_0, window_bounds = array<i64: 104, 784>}, {pipeline_mode = #tpu.pipeline_mode<synchronous>, transform_indices = @transform_1, window_bounds = array<i64: 784, 3>}, {pipeline_mode = #tpu.pipeline_mode<synchronous>, transform_indices = @transform_2, window_bounds = array<i64: 1, 3>}, {transform_indices = @transform_3, window_bounds = array<i64: 104, 3>}]} {
    %c0 = arith.constant 0 : index
    %c0_0 = arith.constant 0 : index
    %0 = vector.load %arg1[%c0, %c0_0] : memref<104x784xf32, #tpu.memory_space<vmem>>, vector<104x784xf32>
    %c0_1 = arith.constant 0 : index
    %c0_2 = arith.constant 0 : index
    %1 = vector.load %arg2[%c0_1, %c0_2] : memref<784x3xf32, #tpu.memory_space<vmem>>, vector<784x3xf32>
    %cst = arith.constant dense<0.000000e+00> : vector<104x3xf32>
    %2 = tpu.matmul %0, %1, %cst {dimension_numbers = #tpu.dot_dimension_numbers<[1], [0], [0], [1], [0, 0, 1, 1], [], []>} : vector<104x784xf32>, vector<784x3xf32>, vector<104x3xf32> -> vector<104x3xf32>
    %c0_3 = arith.constant 0 : index
    %c0_4 = arith.constant 0 : index
    %3 = vector.load %arg3[%c0_3, %c0_4] : memref<1x3xf32, #tpu.memory_space<vmem>>, vector<1x3xf32>
    %4 = vector.broadcast %3 : vector<1x3xf32> to vector<104x3xf32>
    %5 = arith.addf %2, %4 : vector<104x3xf32>
    %c0_5 = arith.constant 0 : index
    %c0_6 = arith.constant 0 : index
    %6 = vector.load %arg4[%c0_5, %c0_6] : memref<104x3xf32, #tpu.memory_space<vmem>>, vector<104x3xf32>
    tpu.vector_store %arg4[%c0_5, %c0_6], %5 {strides = array<i32>} : memref<104x3xf32, #tpu.memory_space<vmem>>, vector<104x3xf32>,
    return
  }
  func.func @transform_0(%arg0: i32) -> (i32, i32) {
    %c0_i32 = arith.constant 0 : i32
    %c0_i32_0 = arith.constant 0 : i32
    return %arg0, %c0_i32 : i32, i32
  }
  func.func @transform_1(%arg0: i32) -> (i32, i32) {
    %c0_i32 = arith.constant 0 : i32
    %c0_i32_0 = arith.constant 0 : i32
    %c0_i32_1 = arith.constant 0 : i32
    return %c0_i32, %c0_i32_0 : i32, i32
  }
  func.func @transform_2(%arg0: i32) -> (i32, i32) {
    %c0_i32 = arith.constant 0 : i32
    %c0_i32_0 = arith.constant 0 : i32
    %c0_i32_1 = arith.constant 0 : i32
    return %c0_i32, %c0_i32_0 : i32, i32
  }
  func.func @transform_3(%arg0: i32) -> (i32, i32) {
    %c0_i32 = arith.constant 0 : i32
    %c0_i32_0 = arith.constant 0 : i32
    return %arg0, %c0_i32 : i32, i32
  }
}

</mosaic_0001>

<llo_original>
// kernel: tpu_custom_call.1
$region0: #{tpu_custom_call.1}
  #allocation0 [shape = 'u32[]', space=smem, size = 0x4, offset = 0x4, fixed_abs, tag = 'smem constant byte address 0x4 - core index']
  #allocation1 [shape = 'u32[144,128]{1,0:T(1,128)}', space=vmem, size = 0x12000, scoped, tag = 'internal scratch']
  %s0 = inlined_call_operand.hbm [shape: f32[200,784], index: 0, kind: input, shape index: {}]
  %s1 = inlined_call_operand.vmem [shape: f32[784,3], index: 1, kind: input, shape index: {}]
  %s2 = inlined_call_operand.vmem [shape: f32[1,3], index: 2, kind: input, shape index: {}]
  %s3 = inlined_call_operand.vmem [shape: f32[200,3], index: 3, kind: output, shape index: {}]
  %s4 = sld [smem:[#allocation0]]
  $region97: #{tpu_custom_call.1} parent=0
    _
  %s6 = ssub.s32 1, %s4
  %s7 = scalar_select 0, %s6, %s4
  $region1: #{tpu_custom_call.1} parent=0
    #allocation2 [shape = 'u8[745472]{0}', space=vmem, size = 0xb6000, scoped, tag = 'input window, operand 0']
    #allocation3 [shape = 's32[2]{0}', space=sflag, size = 0x8, scoped, tag = 'scoped memory for tpu_custom_call.1']
    #allocation4 [shape = 'u8[106496]{0}', space=vmem, size = 0x1a000, scoped, tag = 'output window, operand 0']
    %8 = vsyncpa [#allocation3], 0
    %s9 = scalar_lea.sflag [#allocation3], 1
    %10 = vsyncpa %s9, 0
    loop: start=0, step=1, limit=4
    $region2: #{tpu_custom_call.1} parent=1 // loop_pre_header
      _
    $region3: #{tpu_custom_call.1} parent=1 // loop_header
      %s12 = sphi 0, %s16
      %p13 = scmp.ge.s32.totalorder %s12, 4
      %s22 = sphi 0, %s24
      %s25 = sphi 0, %s22
      %s26 = sphi 0, %s25
      %s42 = sphi 0, %s26
      %s46 = sphi 0, %s46
      %s48 = sphi 0, %s46
      %s49 = sphi 0, %s48
      %s63 = sphi 0, %s49
      %s67 = sphi 0, %s67
      %s69 = sphi 0, %s67
      %s70 = sphi 0, %s69
      %s84 = sphi 0, %s70
      %s90 = sphi 0, %s92
      %s93 = sphi 0, %s90
      %s94 = sphi 0, %s93
      %s110 = sphi 0, %s94
    $region4: #{tpu_custom_call.1} parent=1 // loop_header_branch
      %15 = sbr.rel (%p13) target = $region8
    $region5: #{tpu_custom_call.1} parent=1 // loop_body
      %s17 = ssub.s32 %s12, 1
      %s18 = ssub.s32 %s12, 2
      %s19 = sadd.s32 %s12, 1
      %s20 = ssub.s32 %s12, %s19
      %p21 = scmp.eq.s32.totalorder %s20, 0
      %s23 = sadd.s32 %s22, 1
      %s24 = scalar_select %p21, %s22, %s23
      %p27 = pneg %p21
      %p28 = scmp.eq.s32.totalorder %s12, 1
      %p29 = por %p27, %p28
      %p30 = scmp.ne.s32.totalorder %s22, %s25
      %p31 = scmp.eq.s32.totalorder %s12, 0
      %p32 = por %p30, %p31
      %p33 = scmp.ne.s32.totalorder %s22, %s25
      %p34 = scmp.eq.s32.totalorder %s17, 1
      %p35 = por %p33, %p34
      %p36 = scmp.ne.s32.totalorder %s25, %s26
      %p37 = scmp.eq.s32.totalorder %s17, 0
      %p38 = por %p36, %p37
      %p39 = scmp.ne.s32.totalorder %s25, %s26
      %p40 = scmp.eq.s32.totalorder %s18, 1
      %p41 = por %p39, %p40
      %p43 = scmp.ne.s32.totalorder %s26, %s42
      %p44 = scmp.eq.s32.totalorder %s18, 0
      %p45 = por %p43, %p44
      %s47 = sadd.s32 %s46, 1
      %p50 = scmp.eq.s32.totalorder %s12, 1
      %p51 = scmp.ne.s32.totalorder %s46, %s48
      %p52 = scmp.eq.s32.totalorder %s12, 0
      %p53 = por %p51, %p52
      %p54 = scmp.ne.s32.totalorder %s46, %s48
      %p55 = scmp.eq.s32.totalorder %s17, 1
      %p56 = por %p54, %p55
      %p57 = scmp.ne.s32.totalorder %s48, %s49
      %p58 = scmp.eq.s32.totalorder %s17, 0
      %p59 = por %p57, %p58
      %p60 = scmp.ne.s32.totalorder %s48, %s49
      %p61 = scmp.eq.s32.totalorder %s18, 1
      %p62 = por %p60, %p61
      %p64 = scmp.ne.s32.totalorder %s49, %s63
      %p65 = scmp.eq.s32.totalorder %s18, 0
      %p66 = por %p64, %p65
      %s68 = sadd.s32 %s67, 1
      %p71 = scmp.eq.s32.totalorder %s12, 1
      %p72 = scmp.ne.s32.totalorder %s67, %s69
      %p73 = scmp.eq.s32.totalorder %s12, 0
      %p74 = por %p72, %p73
      %p75 = scmp.ne.s32.totalorder %s67, %s69
      %p76 = scmp.eq.s32.totalorder %s17, 1
      %p77 = por %p75, %p76
      %p78 = scmp.ne.s32.totalorder %s69, %s70
      %p79 = scmp.eq.s32.totalorder %s17, 0
      %p80 = por %p78, %p79
      %p81 = scmp.ne.s32.totalorder %s69, %s70
      %p82 = scmp.eq.s32.totalorder %s18, 1
      %p83 = por %p81, %p82
      %p85 = scmp.ne.s32.totalorder %s70, %s84
      %p86 = scmp.eq.s32.totalorder %s18, 0
      %p87 = por %p85, %p86
      %s88 = ssub.s32 %s12, %s19
      %p89 = scmp.eq.s32.totalorder %s88, 0
      %s91 = sadd.s32 %s90, 1
      %s92 = scalar_select %p89, %s90, %s91
      %p95 = pneg %p89
      %p96 = scmp.eq.s32.totalorder %s12, 1
      %p97 = por %p95, %p96
      %p98 = scmp.ne.s32.totalorder %s90, %s93
      %p99 = scmp.eq.s32.totalorder %s12, 0
      %p100 = por %p98, %p99
      %p101 = scmp.ne.s32.totalorder %s90, %s93
      %p102 = scmp.eq.s32.totalorder %s17, 1
      %p103 = por %p101, %p102
      %p104 = scmp.ne.s32.totalorder %s93, %s94
      %p105 = scmp.eq.s32.totalorder %s17, 0
      %p106 = por %p104, %p105
      %p107 = scmp.ne.s32.totalorder %s93, %s94
      %p108 = scmp.eq.s32.totalorder %s18, 1
      %p109 = por %p107, %p108
      %p111 = scmp.ne.s32.totalorder %s94, %s110
      %p112 = scmp.eq.s32.totalorder %s18, 0
      %p113 = por %p111, %p112
      %p114 = scmp.le.s32.totalorder 1, %s12
      %p115 = scmp.lt.s32.totalorder %s12, 3
      %p116 = pnand %p114, %p115
      %p117 = pneg %p116
      // Predicated region
      $region9: #{tpu_custom_call.1} parent=5 // pred_check
        _
      $region10: #{tpu_custom_call.1} parent=5 // pred_check_branch
        %119 = sbr.rel (%p116) target = $region12
      $region11: #{tpu_custom_call.1} parent=5 // pred_region
        %s120 = ssub.s32 %s12, 1
        // Predicated region
        $region13: #{tpu_custom_call.1} parent=11 // pred_check
          %p121 = pneg %p59
        $region14: #{tpu_custom_call.1} parent=11 // pred_check_branch
          %123 = sbr.rel (%p121) target = $region16
        $region15: #{tpu_custom_call.1} parent=11 // pred_region
          _
        $region16: #{tpu_custom_call.1} parent=11 // pred_fallthru
          _
        // Predicated region
        $region17: #{tpu_custom_call.1} parent=11 // pred_check
          %p124 = pneg %p80
        $region18: #{tpu_custom_call.1} parent=11 // pred_check_branch
          %126 = sbr.rel (%p124) target = $region20
        $region19: #{tpu_custom_call.1} parent=11 // pred_region
          _
        $region20: #{tpu_custom_call.1} parent=11 // pred_fallthru
          _
      $region12: #{tpu_custom_call.1} parent=5 // pred_fallthru
        _
      %p127 = scmp.lt.s32.totalorder %s12, 2
      // Predicated region
      $region21: #{tpu_custom_call.1} parent=5 // pred_check
        %p128 = pneg %p127
      $region22: #{tpu_custom_call.1} parent=5 // pred_check_branch
        %130 = sbr.rel (%p128) target = $region24
      $region23: #{tpu_custom_call.1} parent=5 // pred_region
        // Predicated region
        $region25: #{tpu_custom_call.1} parent=23 // pred_check
          %p131 = pneg %p32
        $region26: #{tpu_custom_call.1} parent=23 // pred_check_branch
          %133 = sbr.rel (%p131) target = $region28
        $region27: #{tpu_custom_call.1} parent=23 // pred_region
          %s134 = sand.u32 %s22, 1
          %s135 = scalar_lea.sflag [#allocation3], %s134
          %s136 = sand.u32 %s22, 1
          %s137 = smul.addr %s136, 728
          %s138 = scalar_lea.vmem [#allocation2], %s137
          %s139 = smul.u32 13, %s12
          %s140 = ssub.s32 25, %s139
          %p141 = scmp.lt.s32.totalorder %s140, 13
          %s142 = scalar_select %p141, %s140, 13
          %s143 = smul.u32 128, %s142
          %s144 = smul.u32 %s143, 7
          %s146 = ssub.s32 11648, %s144
          %147 = vsyncadd %s135, %s146
          %p148 = scmp.ne.s32.totalorder 0, %s144
          %s149 = smul.addr %s139, 7
          %s150 = smul.addr %s149, 128
          %s151 = scalar_lea.hbm %s0, %s150
          %s152 = smul.u32 56, %s142
          %s153 = sshll.u32 %s138, 4
          %s154 = int_to_ptr.vmem [resolvable:$true] %s153
          %s155 = sshll.u32 %s152, 4
          %159 = dma.hbm_to_vmem [thread:$0]  (%p148), %s151, %s155, %s154, %s135, 896, 896, 56
        $region28: #{tpu_custom_call.1} parent=23 // pred_fallthru
          _
      $region24: #{tpu_custom_call.1} parent=5 // pred_fallthru
        _
      %p160 = scmp.le.s32.totalorder 1, %s12
      %p161 = scmp.lt.s32.totalorder %s12, 3
      %p162 = pnand %p160, %p161
      %p163 = pneg %p162
      // Predicated region
      $region29: #{tpu_custom_call.1} parent=5 // pred_check
        _
      $region30: #{tpu_custom_call.1} parent=5 // pred_check_branch
        %165 = sbr.rel (%p162) target = $region32
      $region31: #{tpu_custom_call.1} parent=5 // pred_region
        %s166 = ssub.s32 %s12, 1
        %s167 = sand.u32 %s25, 1
        %s168 = scalar_lea.sflag [#allocation3], %s167
        %s169 = sand.u32 %s25, 1
        %s170 = smul.addr %s169, 728
        %s171 = scalar_lea.vmem [#allocation2], %s170
        // Predicated region
        $region33: #{tpu_custom_call.1} parent=31 // pred_check
          %p172 = pneg %p38
        $region34: #{tpu_custom_call.1} parent=31 // pred_check_branch
          %174 = sbr.rel (%p172) target = $region36
        $region35: #{tpu_custom_call.1} parent=31 // pred_region
          %175 = dma.done %s168, 11648
        $region36: #{tpu_custom_call.1} parent=31 // pred_fallthru
          _
        %s176 = sand.u32 %s25, 1
        %s177 = scalar_lea.sflag [#allocation3], %s176
        %s178 = sand.u32 %s25, 1
        %s179 = smul.addr %s178, 728
        %s180 = scalar_lea.vmem [#allocation2], %s179
        %p181 = pneg %p38
        %p182 = pneg %p35
        %p183 = pneg %p59
        %p184 = pneg %p56
        %p185 = pneg %p80
        %p186 = pneg %p77
        %p187 = pneg %p106
        %p188 = pneg %p103
        %s189 = sand.u32 %s93, 1
        %s190 = sand.u32 %s93, 1
        %s191 = smul.addr %s190, 104
        %s192 = scalar_lea.vmem [#allocation4], %s191
        %s193 = smul.u32 13, %s17
        %s194 = ssub.s32 25, %s193
        %p195 = scmp.lt.s32.totalorder %s194, 13
        %s196 = scalar_select %p195, %s194, 13
        %s197 = smul.u32 128, %s196
        %s198 = smul.u32 %s197, 7
        %s199 = smul.u32 13, %s17
        %s200 = ssub.s32 25, %s199
        %p201 = scmp.lt.s32.totalorder %s200, 13
        %s202 = scalar_select %p201, %s200, 13
        %s203 = smul.u32 128, %s202
        %v204 = vld [vmem:[%s171] sm:$0xff]
        %v205 = vld [vmem:[%s171 + $0x8] sm:$0xff]
        %v206 = vld [vmem:[%s171 + $0x10] sm:$0xff]
        %v207 = vld [vmem:[%s171 + $0x18] sm:$0xff]
        %v208 = vld [vmem:[%s171 + $0x20] sm:$0xff]
        %v209 = vld [vmem:[%s171 + $0x28] sm:$0xff]
        %v210 = vld [vmem:[%s171 + $0x30] sm:$0xff]
        %v211 = vld [vmem:[%s171 + $0x38] sm:$0xff]
        %v212 = vld [vmem:[%s171 + $0x40] sm:$0xff]
        %v213 = vld [vmem:[%s171 + $0x48] sm:$0xff]
        %v214 = vld [vmem:[%s171 + $0x50] sm:$0xff]
        %v215 = vld [vmem:[%s171 + $0x58] sm:$0xff]
        %v216 = vld [vmem:[%s171 + $0x60] sm:$0xff]
        %v217 = vld [vmem:[%s171 + $0x68] sm:$0xff]
        %v218 = vld [vmem:[%s171 + $0x70] sm:$0xff]
        %v219 = vld [vmem:[%s171 + $0x78] sm:$0xff]
        %v220 = vld [vmem:[%s171 + $0x80] sm:$0xff]
        %v221 = vld [vmem:[%s171 + $0x88] sm:$0xff]
        %v222 = vld [vmem:[%s171 + $0x90] sm:$0xff]
        %v223 = vld [vmem:[%s171 + $0x98] sm:$0xff]
        %v224 = vld [vmem:[%s171 + $0xa0] sm:$0xff]
        %v225 = vld [vmem:[%s171 + $0xa8] sm:$0xff]
        %v226 = vld [vmem:[%s171 + $0xb0] sm:$0xff]
        %v227 = vld [vmem:[%s171 + $0xb8] sm:$0xff]
        %v228 = vld [vmem:[%s171 + $0xc0] sm:$0xff]
        %v229 = vld [vmem:[%s171 + $0xc8] sm:$0xff]
        %v230 = vld [vmem:[%s171 + $0xd0] sm:$0xff]
        %v231 = vld [vmem:[%s171 + $0xd8] sm:$0xff]
        %v232 = vld [vmem:[%s171 + $0xe0] sm:$0xff]
        %v233 = vld [vmem:[%s171 + $0xe8] sm:$0xff]
        %v234 = vld [vmem:[%s171 + $0xf0] sm:$0xff]
        %v235 = vld [vmem:[%s171 + $0xf8] sm:$0xff]
        %v236 = vld [vmem:[%s171 + $0x100] sm:$0xff]
        %v237 = vld [vmem:[%s171 + $0x108] sm:$0xff]
        %v238 = vld [vmem:[%s171 + $0x110] sm:$0xff]
        %v239 = vld [vmem:[%s171 + $0x118] sm:$0xff]
        %v240 = vld [vmem:[%s171 + $0x120] sm:$0xff]
        %v241 = vld [vmem:[%s171 + $0x128] sm:$0xff]
        %v242 = vld [vmem:[%s171 + $0x130] sm:$0xff]
        %v243 = vld [vmem:[%s171 + $0x138] sm:$0xff]
        %v244 = vld [vmem:[%s171 + $0x140] sm:$0xff]
        %v245 = vld [vmem:[%s171 + $0x148] sm:$0xff]
        %v246 = vld [vmem:[%s171 + $0x150] sm:$0xff]
        %v247 = vld [vmem:[%s171 + $0x158] sm:$0xff]
        %v248 = vld [vmem:[%s171 + $0x160] sm:$0xff]
        %v249 = vld [vmem:[%s171 + $0x168] sm:$0xff]
        %v250 = vld [vmem:[%s171 + $0x170] sm:$0xff]
        %v251 = vld [vmem:[%s171 + $0x178] sm:$0xff]
        %v252 = vld [vmem:[%s171 + $0x180] sm:$0xff]
        %v253 = vld [vmem:[%s171 + $0x188] sm:$0xff]
        %v254 = vld [vmem:[%s171 + $0x190] sm:$0xff]
        %v255 = vld [vmem:[%s171 + $0x198] sm:$0xff]
        %v256 = vld [vmem:[%s171 + $0x1a0] sm:$0xff]
        %v257 = vld [vmem:[%s171 + $0x1a8] sm:$0xff]
        %v258 = vld [vmem:[%s171 + $0x1b0] sm:$0xff]
        %v259 = vld [vmem:[%s171 + $0x1b8] sm:$0xff]
        %v260 = vld [vmem:[%s171 + $0x1c0] sm:$0xff]
        %v261 = vld [vmem:[%s171 + $0x1c8] sm:$0xff]
        %v262 = vld [vmem:[%s171 + $0x1d0] sm:$0xff]
        %v263 = vld [vmem:[%s171 + $0x1d8] sm:$0xff]
        %v264 = vld [vmem:[%s171 + $0x1e0] sm:$0xff]
        %v265 = vld [vmem:[%s171 + $0x1e8] sm:$0xff]
        %v266 = vld [vmem:[%s171 + $0x1f0] sm:$0xff]
        %v267 = vld [vmem:[%s171 + $0x1f8] sm:$0xff]
        %v268 = vld [vmem:[%s171 + $0x200] sm:$0xff]
        %v269 = vld [vmem:[%s171 + $0x208] sm:$0xff]
        %v270 = vld [vmem:[%s171 + $0x210] sm:$0xff]
        %v271 = vld [vmem:[%s171 + $0x218] sm:$0xff]
        %v272 = vld [vmem:[%s171 + $0x220] sm:$0xff]
        %v273 = vld [vmem:[%s171 + $0x228] sm:$0xff]
        %v274 = vld [vmem:[%s171 + $0x230] sm:$0xff]
        %v275 = vld [vmem:[%s171 + $0x238] sm:$0xff]
        %v276 = vld [vmem:[%s171 + $0x240] sm:$0xff]
        %v277 = vld [vmem:[%s171 + $0x248] sm:$0xff]
        %v278 = vld [vmem:[%s171 + $0x250] sm:$0xff]
        %v279 = vld [vmem:[%s171 + $0x258] sm:$0xff]
        %v280 = vld [vmem:[%s171 + $0x260] sm:$0xff]
        %v281 = vld [vmem:[%s171 + $0x268] sm:$0xff]
        %v282 = vld [vmem:[%s171 + $0x270] sm:$0xff]
        %v283 = vld [vmem:[%s171 + $0x278] sm:$0xff]
        %v284 = vld [vmem:[%s171 + $0x280] sm:$0xff]
        %v285 = vld [vmem:[%s171 + $0x288] sm:$0xff]
        %v286 = vld [vmem:[%s171 + $0x290] sm:$0xff]
        %v287 = vld [vmem:[%s171 + $0x298] sm:$0xff]
        %v288 = vld [vmem:[%s171 + $0x2a0] sm:$0xff]
        %v289 = vld [vmem:[%s171 + $0x2a8] sm:$0xff]
        %v290 = vld [vmem:[%s171 + $0x2b0] sm:$0xff]
        %v291 = vld [vmem:[%s171 + $0x2b8] sm:$0xff]
        %v292 = vld [vmem:[%s171 + $0x2c0] sm:$0xff]
        %v293 = vld [vmem:[%s171 + $0x2c8] sm:$0xff]
        %v294 = vld [vmem:[%s171 + $0x2d0] sm:$0xff]
        %v295 = vld [vmem:[%s1] sm:$0xff]
        %v296 = vld [vmem:[%s1 + $0x8] sm:$0xff]
        %v297 = vld [vmem:[%s1 + $0x10] sm:$0xff]
        %v298 = vld [vmem:[%s1 + $0x18] sm:$0xff]
        %v299 = vld [vmem:[%s1 + $0x20] sm:$0xff]
        %v300 = vld [vmem:[%s1 + $0x28] sm:$0xff]
        %v301 = vld [vmem:[%s1 + $0x30] sm:$0xff]
        %v302 = vld [vmem:[%s1 + $0x38] sm:$0xff]
        %v303 = vld [vmem:[%s1 + $0x40] sm:$0xff]
        %v304 = vld [vmem:[%s1 + $0x48] sm:$0xff]
        %v305 = vld [vmem:[%s1 + $0x50] sm:$0xff]
        %v306 = vld [vmem:[%s1 + $0x58] sm:$0xff]
        %v307 = vld [vmem:[%s1 + $0x60] sm:$0xff]
        %v308 = vld [vmem:[%s1 + $0x68] sm:$0xff]
        %v309 = vld [vmem:[%s1 + $0x70] sm:$0xff]
        %v310 = vld [vmem:[%s1 + $0x78] sm:$0xff]
        %v311 = vld [vmem:[%s1 + $0x80] sm:$0xff]
        %v312 = vld [vmem:[%s1 + $0x88] sm:$0xff]
        %v313 = vld [vmem:[%s1 + $0x90] sm:$0xff]
        %v314 = vld [vmem:[%s1 + $0x98] sm:$0xff]
        %v315 = vld [vmem:[%s1 + $0xa0] sm:$0xff]
        %v316 = vld [vmem:[%s1 + $0xa8] sm:$0xff]
        %v317 = vld [vmem:[%s1 + $0xb0] sm:$0xff]
        %v318 = vld [vmem:[%s1 + $0xb8] sm:$0xff]
        %v319 = vld [vmem:[%s1 + $0xc0] sm:$0xff]
        %v320 = vld [vmem:[%s1 + $0xc8] sm:$0xff]
        %v321 = vld [vmem:[%s1 + $0xd0] sm:$0xff]
        %v322 = vld [vmem:[%s1 + $0xd8] sm:$0xff]
        %v323 = vld [vmem:[%s1 + $0xe0] sm:$0xff]
        %v324 = vld [vmem:[%s1 + $0xe8] sm:$0xff]
        %v325 = vld [vmem:[%s1 + $0xf0] sm:$0xff]
        %v326 = vld [vmem:[%s1 + $0xf8] sm:$0xff]
        %v327 = vld [vmem:[%s1 + $0x100] sm:$0xff]
        %v328 = vld [vmem:[%s1 + $0x108] sm:$0xff]
        %v329 = vld [vmem:[%s1 + $0x110] sm:$0xff]
        %v330 = vld [vmem:[%s1 + $0x118] sm:$0xff]
        %v331 = vld [vmem:[%s1 + $0x120] sm:$0xff]
        %v332 = vld [vmem:[%s1 + $0x128] sm:$0xff]
        %v333 = vld [vmem:[%s1 + $0x130] sm:$0xff]
        %v334 = vld [vmem:[%s1 + $0x138] sm:$0xff]
        %v335 = vld [vmem:[%s1 + $0x140] sm:$0xff]
        %v336 = vld [vmem:[%s1 + $0x148] sm:$0xff]
        %v337 = vld [vmem:[%s1 + $0x150] sm:$0xff]
        %v338 = vld [vmem:[%s1 + $0x158] sm:$0xff]
        %v339 = vld [vmem:[%s1 + $0x160] sm:$0xff]
        %v340 = vld [vmem:[%s1 + $0x168] sm:$0xff]
        %v341 = vld [vmem:[%s1 + $0x170] sm:$0xff]
        %v342 = vld [vmem:[%s1 + $0x178] sm:$0xff]
        %v343 = vld [vmem:[%s1 + $0x180] sm:$0xff]
        %v344 = vld [vmem:[%s1 + $0x188] sm:$0xff]
        %v345 = vld [vmem:[%s1 + $0x190] sm:$0xff]
        %v346 = vld [vmem:[%s1 + $0x198] sm:$0xff]
        %v347 = vld [vmem:[%s1 + $0x1a0] sm:$0xff]
        %v348 = vld [vmem:[%s1 + $0x1a8] sm:$0xff]
        %v349 = vld [vmem:[%s1 + $0x1b0] sm:$0xff]
        %v350 = vld [vmem:[%s1 + $0x1b8] sm:$0xff]
        %v351 = vld [vmem:[%s1 + $0x1c0] sm:$0xff]
        %v352 = vld [vmem:[%s1 + $0x1c8] sm:$0xff]
        %v353 = vld [vmem:[%s1 + $0x1d0] sm:$0xff]
        %v354 = vld [vmem:[%s1 + $0x1d8] sm:$0xff]
        %v355 = vld [vmem:[%s1 + $0x1e0] sm:$0xff]
        %v356 = vld [vmem:[%s1 + $0x1e8] sm:$0xff]
        %v357 = vld [vmem:[%s1 + $0x1f0] sm:$0xff]
        %v358 = vld [vmem:[%s1 + $0x1f8] sm:$0xff]
        %v359 = vld [vmem:[%s1 + $0x200] sm:$0xff]
        %v360 = vld [vmem:[%s1 + $0x208] sm:$0xff]
        %v361 = vld [vmem:[%s1 + $0x210] sm:$0xff]
        %v362 = vld [vmem:[%s1 + $0x218] sm:$0xff]
        %v363 = vld [vmem:[%s1 + $0x220] sm:$0xff]
        %v364 = vld [vmem:[%s1 + $0x228] sm:$0xff]
        %v365 = vld [vmem:[%s1 + $0x230] sm:$0xff]
        %v366 = vld [vmem:[%s1 + $0x238] sm:$0xff]
        %v367 = vld [vmem:[%s1 + $0x240] sm:$0xff]
        %v368 = vld [vmem:[%s1 + $0x248] sm:$0xff]
        %v369 = vld [vmem:[%s1 + $0x250] sm:$0xff]
        %v370 = vld [vmem:[%s1 + $0x258] sm:$0xff]
        %v371 = vld [vmem:[%s1 + $0x260] sm:$0xff]
        %v372 = vld [vmem:[%s1 + $0x268] sm:$0xff]
        %v373 = vld [vmem:[%s1 + $0x270] sm:$0xff]
        %v374 = vld [vmem:[%s1 + $0x278] sm:$0xff]
        %v375 = vld [vmem:[%s1 + $0x280] sm:$0xff]
        %v376 = vld [vmem:[%s1 + $0x288] sm:$0xff]
        %v377 = vld [vmem:[%s1 + $0x290] sm:$0xff]
        %v378 = vld [vmem:[%s1 + $0x298] sm:$0xff]
        %v379 = vld [vmem:[%s1 + $0x2a0] sm:$0xff]
        %v380 = vld [vmem:[%s1 + $0x2a8] sm:$0xff]
        %v381 = vld [vmem:[%s1 + $0x2b0] sm:$0xff]
        %v382 = vld [vmem:[%s1 + $0x2b8] sm:$0xff]
        %v383 = vld [vmem:[%s1 + $0x2c0] sm:$0xff]
        %v384 = vld [vmem:[%s1 + $0x2c8] sm:$0xff]
        %v385 = vld [vmem:[%s1 + $0x2d0] sm:$0xff]
        %v386 = vld [vmem:[%s1 + $0x2d8] sm:$0xff]
        %v387 = vld [vmem:[%s1 + $0x2e0] sm:$0xff]
        %v388 = vld [vmem:[%s1 + $0x2e8] sm:$0xff]
        %v389 = vld [vmem:[%s1 + $0x2f0] sm:$0xff]
        %v390 = vld [vmem:[%s1 + $0x2f8] sm:$0xff]
        %v391 = vld [vmem:[%s1 + $0x300] sm:$0xff]
        %v392 = vld [vmem:[%s1 + $0x308] sm:$0xff]
        %v393 = vld [vmem:[%s2] sm:$0x1]
        %v395 = vlaneseq
        %v396 = vshrl.u32 %v395, 7
        %v397 = vsub.s32 0, %v396
        %v398 = vrot.slane %v393, %v397
        %vm400 = vcmask 130048
        %v402 = vsel %vm400, %v210, 0
        %v405 = vsel %vm400, %v217, 0
        %v408 = vsel %vm400, %v224, 0
        %v411 = vsel %vm400, %v231, 0
        %v414 = vsel %vm400, %v238, 0
        %v417 = vsel %vm400, %v245, 0
        %v420 = vsel %vm400, %v252, 0
        %v423 = vsel %vm400, %v259, 0
        %v426 = vsel %vm400, %v266, 0
        %v429 = vsel %vm400, %v273, 0
        %v432 = vsel %vm400, %v280, 0
        %v435 = vsel %vm400, %v287, 0
        %v438 = vsel %vm400, %v294, 0
        %440 = vmatprep.subr.mxu0 0.0
        %441 = vmatpush1.msra.mxu0 %v295
        %442 = vmatprep.subr.mxu0 0.0
        %443 = vmatpush1.msra.mxu0 %v296
        %444 = vmatprep.subr.mxu0 0.0
        %445 = vmatpush1.msra.mxu0 %v297
        %446 = vmatprep.subr.mxu0 0.0
        %447 = vmatpush1.msra.mxu0 %v298
        %448 = vmatprep.subr.mxu0 0.0
        %449 = vmatpush1.msra.mxu0 %v299
        %450 = vmatprep.subr.mxu0 0.0
        %451 = vmatpush1.msra.mxu0 %v300
        %452 = vmatprep.subr.mxu0 0.0
        %453 = vmatpush1.msra.mxu0 %v301
        %454 = vmatprep.subr.mxu0 0.0
        %455 = vmatpush1.msra.mxu0 %v302
        %456 = vmatprep.subr.mxu0 0.0
        %457 = vmatpush1.msra.mxu0 %v303
        %458 = vmatprep.subr.mxu0 0.0
        %459 = vmatpush1.msra.mxu0 %v304
        %460 = vmatprep.subr.mxu0 0.0
        %461 = vmatpush1.msra.mxu0 %v305
        %462 = vmatprep.subr.mxu0 0.0
        %463 = vmatpush1.msra.mxu0 %v306
        %464 = vmatprep.subr.mxu0 0.0
        %465 = vmatpush1.msra.mxu0 %v307
        %466 = vmatprep.subr.mxu0 0.0
        %467 = vmatpush1.msra.mxu0 %v308
        %468 = vmatprep.subr.mxu0 0.0
        %469 = vmatpush1.msra.mxu0 %v309
        %470 = vmatprep.subr.mxu0 0.0
        %471 = vmatpush1.msra.mxu0 %v310
        %472 = vmatprep.subr.mxu0 0.0
        %473 = vmatpush1.msra.mxu0 %v311
        %474 = vmatprep.subr.mxu0 0.0
        %475 = vmatpush1.msra.mxu0 %v312
        %476 = vmatprep.subr.mxu0 0.0
        %477 = vmatpush1.msra.mxu0 %v313
        %478 = vmatprep.subr.mxu0 0.0
        %479 = vmatpush1.msra.mxu0 %v314
        %480 = vmatprep.subr.mxu0 0.0
        %481 = vmatpush1.msra.mxu0 %v315
        %482 = vmatprep.subr.mxu0 0.0
        %483 = vmatpush1.msra.mxu0 %v316
        %484 = vmatprep.subr.mxu0 0.0
        %485 = vmatpush1.msra.mxu0 %v317
        %486 = vmatprep.subr.mxu0 0.0
        %487 = vmatpush1.msra.mxu0 %v318
        %488 = vmatprep.subr.mxu0 0.0
        %489 = vmatpush1.msra.mxu0 %v319
        %490 = vmatprep.subr.mxu0 0.0
        %491 = vmatpush1.msra.mxu0 %v320
        %492 = vmatprep.subr.mxu0 0.0
        %493 = vmatpush1.msra.mxu0 %v321
        %494 = vmatprep.subr.mxu0 0.0
        %495 = vmatpush1.msra.mxu0 %v322
        %496 = vmatprep.subr.mxu0 0.0
        %497 = vmatpush1.msra.mxu0 %v323
        %498 = vmatprep.subr.mxu0 0.0
        %499 = vmatpush1.msra.mxu0 %v324
        %500 = vmatprep.subr.mxu0 0.0
        %501 = vmatpush1.msra.mxu0 %v325
        %502 = vmatprep.subr.mxu0 0.0
        %503 = vmatpush1.msra.mxu0 %v326
        %504 = vmatprep.mubr.f32.mxu0 %v205
        %505 = vmatmul.mubr.f32.gmra.mrb[0].mxu0 %v204
        %v506 = vpop.f32.mrb[0].mxu0
        %v507 = vadd.f32 %v398, %v506
        %v508 = vpop.f32.mrb[0].mxu0
        %509 = vmatprep.mubr.f32.mxu0 %v212
        %510 = vmatmul.mubr.f32.gmra.mrb[0].mxu0 %v211
        %v511 = vpop.f32.mrb[0].mxu0
        %v512 = vadd.f32 %v398, %v511
        %v513 = vpop.f32.mrb[0].mxu0
        %514 = vmatprep.mubr.f32.mxu0 %v219
        %515 = vmatmul.mubr.f32.gmra.mrb[0].mxu0 %v218
        %v516 = vpop.f32.mrb[0].mxu0
        %v517 = vadd.f32 %v398, %v516
        %v518 = vpop.f32.mrb[0].mxu0
        %519 = vmatprep.mubr.f32.mxu0 %v226
        %520 = vmatmul.mubr.f32.gmra.mrb[0].mxu0 %v225
        %v521 = vpop.f32.mrb[0].mxu0
        %v522 = vadd.f32 %v398, %v521
        %v523 = vpop.f32.mrb[0].mxu0
        %524 = vmatprep.mubr.f32.mxu0 %v233
        %525 = vmatmul.mubr.f32.gmra.mrb[0].mxu0 %v232
        %v526 = vpop.f32.mrb[0].mxu0
        %v527 = vadd.f32 %v398, %v526
        %v528 = vpop.f32.mrb[0].mxu0
        %529 = vmatprep.mubr.f32.mxu0 %v240
        %530 = vmatmul.mubr.f32.gmra.mrb[0].mxu0 %v239
        %v531 = vpop.f32.mrb[0].mxu0
        %v532 = vadd.f32 %v398, %v531
        %v533 = vpop.f32.mrb[0].mxu0
        %534 = vmatprep.mubr.f32.mxu0 %v247
        %535 = vmatmul.mubr.f32.gmra.mrb[0].mxu0 %v246
        %v536 = vpop.f32.mrb[0].mxu0
        %v537 = vadd.f32 %v398, %v536
        %v538 = vpop.f32.mrb[0].mxu0
        %539 = vmatprep.mubr.f32.mxu0 %v254
        %540 = vmatmul.mubr.f32.gmra.mrb[0].mxu0 %v253
        %v541 = vpop.f32.mrb[0].mxu0
        %v542 = vadd.f32 %v398, %v541
        %v543 = vpop.f32.mrb[0].mxu0
        %544 = vmatprep.mubr.f32.mxu0 %v261
        %545 = vmatmul.mubr.f32.gmra.mrb[0].mxu0 %v260
        %v546 = vpop.f32.mrb[0].mxu0
        %v547 = vadd.f32 %v398, %v546
        %v548 = vpop.f32.mrb[0].mxu0
        %549 = vmatprep.mubr.f32.mxu0 %v268
        %550 = vmatmul.mubr.f32.gmra.mrb[0].mxu0 %v267
        %v551 = vpop.f32.mrb[0].mxu0
        %v552 = vadd.f32 %v398, %v551
        %v553 = vpop.f32.mrb[0].mxu0
        %554 = vmatprep.mubr.f32.mxu0 %v275
        %555 = vmatmul.mubr.f32.gmra.mrb[0].mxu0 %v274
        %v556 = vpop.f32.mrb[0].mxu0
        %v557 = vadd.f32 %v398, %v556
        %v558 = vpop.f32.mrb[0].mxu0
        %559 = vmatprep.mubr.f32.mxu0 %v282
        %560 = vmatmul.mubr.f32.gmra.mrb[0].mxu0 %v281
        %v561 = vpop.f32.mrb[0].mxu0
        %v562 = vadd.f32 %v398, %v561
        %v563 = vpop.f32.mrb[0].mxu0
        %564 = vmatprep.mubr.f32.mxu0 %v289
        %565 = vmatmul.mubr.f32.gmra.mrb[0].mxu0 %v288
        %v566 = vpop.f32.mrb[0].mxu0
        %v567 = vadd.f32 %v398, %v566
        %v568 = vpop.f32.mrb[0].mxu0
        %569 = vdwg.mxu0
        %570 = vmatprep.subr.mxu0 0.0
        %571 = vmatpush1.msra.mxu0 %v327
        %572 = vmatprep.subr.mxu0 0.0
        %573 = vmatpush1.msra.mxu0 %v328
        %574 = vmatprep.subr.mxu0 0.0
        %575 = vmatpush1.msra.mxu0 %v329
        %576 = vmatprep.subr.mxu0 0.0
        %577 = vmatpush1.msra.mxu0 %v330
        %578 = vmatprep.subr.mxu0 0.0
        %579 = vmatpush1.msra.mxu0 %v331
        %580 = vmatprep.subr.mxu0 0.0
        %581 = vmatpush1.msra.mxu0 %v332
        %582 = vmatprep.subr.mxu0 0.0
        %583 = vmatpush1.msra.mxu0 %v333
        %584 = vmatprep.subr.mxu0 0.0
        %585 = vmatpush1.msra.mxu0 %v334
        %586 = vmatprep.subr.mxu0 0.0
        %587 = vmatpush1.msra.mxu0 %v335
        %588 = vmatprep.subr.mxu0 0.0
        %589 = vmatpush1.msra.mxu0 %v336
        %590 = vmatprep.subr.mxu0 0.0
        %591 = vmatpush1.msra.mxu0 %v337
        %592 = vmatprep.subr.mxu0 0.0
        %593 = vmatpush1.msra.mxu0 %v338
        %594 = vmatprep.subr.mxu0 0.0
        %595 = vmatpush1.msra.mxu0 %v339
        %596 = vmatprep.subr.mxu0 0.0
        %597 = vmatpush1.msra.mxu0 %v340
        %598 = vmatprep.subr.mxu0 0.0
        %599 = vmatpush1.msra.mxu0 %v341
        %600 = vmatprep.subr.mxu0 0.0
        %601 = vmatpush1.msra.mxu0 %v342
        %602 = vmatprep.subr.mxu0 0.0
        %603 = vmatpush1.msra.mxu0 %v343
        %604 = vmatprep.subr.mxu0 0.0
        %605 = vmatpush1.msra.mxu0 %v344
        %606 = vmatprep.subr.mxu0 0.0
        %607 = vmatpush1.msra.mxu0 %v345
        %608 = vmatprep.subr.mxu0 0.0
        %609 = vmatpush1.msra.mxu0 %v346
        %610 = vmatprep.subr.mxu0 0.0
        %611 = vmatpush1.msra.mxu0 %v347
        %612 = vmatprep.subr.mxu0 0.0
        %613 = vmatpush1.msra.mxu0 %v348
        %614 = vmatprep.subr.mxu0 0.0
        %615 = vmatpush1.msra.mxu0 %v349
        %616 = vmatprep.subr.mxu0 0.0
        %617 = vmatpush1.msra.mxu0 %v350
        %618 = vmatprep.subr.mxu0 0.0
        %619 = vmatpush1.msra.mxu0 %v351
        %620 = vmatprep.subr.mxu0 0.0
        %621 = vmatpush1.msra.mxu0 %v352
        %622 = vmatprep.subr.mxu0 0.0
        %623 = vmatpush1.msra.mxu0 %v353
        %624 = vmatprep.subr.mxu0 0.0
        %625 = vmatpush1.msra.mxu0 %v354
        %626 = vmatprep.subr.mxu0 0.0
        %627 = vmatpush1.msra.mxu0 %v355
        %628 = vmatprep.subr.mxu0 0.0
        %629 = vmatpush1.msra.mxu0 %v356
        %630 = vmatprep.subr.mxu0 0.0
        %631 = vmatpush1.msra.mxu0 %v357
        %632 = vmatprep.subr.mxu0 0.0
        %633 = vmatpush1.msra.mxu0 %v358
        %634 = vmatprep.mubr.f32.mxu0 %v207
        %635 = vmatmul.mubr.f32.gmra.mrb[0].mxu0 %v206
        %v636 = vpop.f32.mrb[0].mxu0
        %v637 = vadd.f32 %v507, %v636
        %v638 = vpop.f32.mrb[0].mxu0
        %639 = vmatprep.mubr.f32.mxu0 %v214
        %640 = vmatmul.mubr.f32.gmra.mrb[0].mxu0 %v213
        %v641 = vpop.f32.mrb[0].mxu0
        %v642 = vadd.f32 %v512, %v641
        %v643 = vpop.f32.mrb[0].mxu0
        %644 = vmatprep.mubr.f32.mxu0 %v221
        %645 = vmatmul.mubr.f32.gmra.mrb[0].mxu0 %v220
        %v646 = vpop.f32.mrb[0].mxu0
        %v647 = vadd.f32 %v517, %v646
        %v648 = vpop.f32.mrb[0].mxu0
        %649 = vmatprep.mubr.f32.mxu0 %v228
        %650 = vmatmul.mubr.f32.gmra.mrb[0].mxu0 %v227
        %v651 = vpop.f32.mrb[0].mxu0
        %v652 = vadd.f32 %v522, %v651
        %v653 = vpop.f32.mrb[0].mxu0
        %654 = vmatprep.mubr.f32.mxu0 %v235
        %655 = vmatmul.mubr.f32.gmra.mrb[0].mxu0 %v234
        %v656 = vpop.f32.mrb[0].mxu0
        %v657 = vadd.f32 %v527, %v656
        %v658 = vpop.f32.mrb[0].mxu0
        %659 = vmatprep.mubr.f32.mxu0 %v242
        %660 = vmatmul.mubr.f32.gmra.mrb[0].mxu0 %v241
        %v661 = vpop.f32.mrb[0].mxu0
        %v662 = vadd.f32 %v532, %v661
        %v663 = vpop.f32.mrb[0].mxu0
        %664 = vmatprep.mubr.f32.mxu0 %v249
        %665 = vmatmul.mubr.f32.gmra.mrb[0].mxu0 %v248
        %v666 = vpop.f32.mrb[0].mxu0
        %v667 = vadd.f32 %v537, %v666
        %v668 = vpop.f32.mrb[0].mxu0
        %669 = vmatprep.mubr.f32.mxu0 %v256
        %670 = vmatmul.mubr.f32.gmra.mrb[0].mxu0 %v255
        %v671 = vpop.f32.mrb[0].mxu0
        %v672 = vadd.f32 %v542, %v671
        %v673 = vpop.f32.mrb[0].mxu0
        %674 = vmatprep.mubr.f32.mxu0 %v263
        %675 = vmatmul.mubr.f32.gmra.mrb[0].mxu0 %v262
        %v676 = vpop.f32.mrb[0].mxu0
        %v677 = vadd.f32 %v547, %v676
        %v678 = vpop.f32.mrb[0].mxu0
        %679 = vmatprep.mubr.f32.mxu0 %v270
        %680 = vmatmul.mubr.f32.gmra.mrb[0].mxu0 %v269
        %v681 = vpop.f32.mrb[0].mxu0
        %v682 = vadd.f32 %v552, %v681
        %v683 = vpop.f32.mrb[0].mxu0
        %684 = vmatprep.mubr.f32.mxu0 %v277
        %685 = vmatmul.mubr.f32.gmra.mrb[0].mxu0 %v276
        %v686 = vpop.f32.mrb[0].mxu0
        %v687 = vadd.f32 %v557, %v686
        %v688 = vpop.f32.mrb[0].mxu0
        %689 = vmatprep.mubr.f32.mxu0 %v284
        %690 = vmatmul.mubr.f32.gmra.mrb[0].mxu0 %v283
        %v691 = vpop.f32.mrb[0].mxu0
        %v692 = vadd.f32 %v562, %v691
        %v693 = vpop.f32.mrb[0].mxu0
        %694 = vmatprep.mubr.f32.mxu0 %v291
        %695 = vmatmul.mubr.f32.gmra.mrb[0].mxu0 %v290
        %v696 = vpop.f32.mrb[0].mxu0
        %v697 = vadd.f32 %v567, %v696
        %v698 = vpop.f32.mrb[0].mxu0
        %699 = vdwg.mxu0
        %700 = vmatprep.subr.mxu0 0.0
        %701 = vmatpush1.msra.mxu0 %v359
        %702 = vmatprep.subr.mxu0 0.0
        %703 = vmatpush1.msra.mxu0 %v360
        %704 = vmatprep.subr.mxu0 0.0
        %705 = vmatpush1.msra.mxu0 %v361
        %706 = vmatprep.subr.mxu0 0.0
        %707 = vmatpush1.msra.mxu0 %v362
        %708 = vmatprep.subr.mxu0 0.0
        %709 = vmatpush1.msra.mxu0 %v363
        %710 = vmatprep.subr.mxu0 0.0
        %711 = vmatpush1.msra.mxu0 %v364
        %712 = vmatprep.subr.mxu0 0.0
        %713 = vmatpush1.msra.mxu0 %v365
        %714 = vmatprep.subr.mxu0 0.0
        %715 = vmatpush1.msra.mxu0 %v366
        %716 = vmatprep.subr.mxu0 0.0
        %717 = vmatpush1.msra.mxu0 %v367
        %718 = vmatprep.subr.mxu0 0.0
        %719 = vmatpush1.msra.mxu0 %v368
        %720 = vmatprep.subr.mxu0 0.0
        %721 = vmatpush1.msra.mxu0 %v369
        %722 = vmatprep.subr.mxu0 0.0
        %723 = vmatpush1.msra.mxu0 %v370
        %724 = vmatprep.subr.mxu0 0.0
        %725 = vmatpush1.msra.mxu0 %v371
        %726 = vmatprep.subr.mxu0 0.0
        %727 = vmatpush1.msra.mxu0 %v372
        %728 = vmatprep.subr.mxu0 0.0
        %729 = vmatpush1.msra.mxu0 %v373
        %730 = vmatprep.subr.mxu0 0.0
        %731 = vmatpush1.msra.mxu0 %v374
        %732 = vmatprep.subr.mxu0 0.0
        %733 = vmatpush1.msra.mxu0 %v375
        %734 = vmatprep.subr.mxu0 0.0
        %735 = vmatpush1.msra.mxu0 %v376
        %736 = vmatprep.subr.mxu0 0.0
        %737 = vmatpush1.msra.mxu0 %v377
        %738 = vmatprep.subr.mxu0 0.0
        %739 = vmatpush1.msra.mxu0 %v378
        %740 = vmatprep.subr.mxu0 0.0
        %741 = vmatpush1.msra.mxu0 %v379
        %742 = vmatprep.subr.mxu0 0.0
        %743 = vmatpush1.msra.mxu0 %v380
        %744 = vmatprep.subr.mxu0 0.0
        %745 = vmatpush1.msra.mxu0 %v381
        %746 = vmatprep.subr.mxu0 0.0
        %747 = vmatpush1.msra.mxu0 %v382
        %748 = vmatprep.subr.mxu0 0.0
        %749 = vmatpush1.msra.mxu0 %v383
        %750 = vmatprep.subr.mxu0 0.0
        %751 = vmatpush1.msra.mxu0 %v384
        %752 = vmatprep.subr.mxu0 0.0
        %753 = vmatpush1.msra.mxu0 %v385
        %754 = vmatprep.subr.mxu0 0.0
        %755 = vmatpush1.msra.mxu0 %v386
        %756 = vmatprep.subr.mxu0 0.0
        %757 = vmatpush1.msra.mxu0 %v387
        %758 = vmatprep.subr.mxu0 0.0
        %759 = vmatpush1.msra.mxu0 %v388
        %760 = vmatprep.subr.mxu0 0.0
        %761 = vmatpush1.msra.mxu0 %v389
        %762 = vmatprep.subr.mxu0 0.0
        %763 = vmatpush1.msra.mxu0 %v390
        %764 = vmatprep.mubr.f32.mxu0 %v209
        %765 = vmatmul.mubr.f32.gmra.mrb[0].mxu0 %v208
        %v766 = vpop.f32.mrb[0].mxu0
        %v767 = vadd.f32 %v637, %v766
        %v768 = vpop.f32.mrb[0].mxu0
        %769 = vmatprep.mubr.f32.mxu0 %v216
        %770 = vmatmul.mubr.f32.gmra.mrb[0].mxu0 %v215
        %v771 = vpop.f32.mrb[0].mxu0
        %v772 = vadd.f32 %v642, %v771
        %v773 = vpop.f32.mrb[0].mxu0
        %774 = vmatprep.mubr.f32.mxu0 %v223
        %775 = vmatmul.mubr.f32.gmra.mrb[0].mxu0 %v222
        %v776 = vpop.f32.mrb[0].mxu0
        %v777 = vadd.f32 %v647, %v776
        %v778 = vpop.f32.mrb[0].mxu0
        %779 = vmatprep.mubr.f32.mxu0 %v230
        %780 = vmatmul.mubr.f32.gmra.mrb[0].mxu0 %v229
        %v781 = vpop.f32.mrb[0].mxu0
        %v782 = vadd.f32 %v652, %v781
        %v783 = vpop.f32.mrb[0].mxu0
        %784 = vmatprep.mubr.f32.mxu0 %v237
        %785 = vmatmul.mubr.f32.gmra.mrb[0].mxu0 %v236
        %v786 = vpop.f32.mrb[0].mxu0
        %v787 = vadd.f32 %v657, %v786
        %v788 = vpop.f32.mrb[0].mxu0
        %789 = vmatprep.mubr.f32.mxu0 %v244
        %790 = vmatmul.mubr.f32.gmra.mrb[0].mxu0 %v243
        %v791 = vpop.f32.mrb[0].mxu0
        %v792 = vadd.f32 %v662, %v791
        %v793 = vpop.f32.mrb[0].mxu0
        %794 = vmatprep.mubr.f32.mxu0 %v251
        %795 = vmatmul.mubr.f32.gmra.mrb[0].mxu0 %v250
        %v796 = vpop.f32.mrb[0].mxu0
        %v797 = vadd.f32 %v667, %v796
        %v798 = vpop.f32.mrb[0].mxu0
        %799 = vmatprep.mubr.f32.mxu0 %v258
        %800 = vmatmul.mubr.f32.gmra.mrb[0].mxu0 %v257
        %v801 = vpop.f32.mrb[0].mxu0
        %v802 = vadd.f32 %v672, %v801
        %v803 = vpop.f32.mrb[0].mxu0
        %804 = vmatprep.mubr.f32.mxu0 %v265
        %805 = vmatmul.mubr.f32.gmra.mrb[0].mxu0 %v264
        %v806 = vpop.f32.mrb[0].mxu0
        %v807 = vadd.f32 %v677, %v806
        %v808 = vpop.f32.mrb[0].mxu0
        %809 = vmatprep.mubr.f32.mxu0 %v272
        %810 = vmatmul.mubr.f32.gmra.mrb[0].mxu0 %v271
        %v811 = vpop.f32.mrb[0].mxu0
        %v812 = vadd.f32 %v682, %v811
        %v813 = vpop.f32.mrb[0].mxu0
        %814 = vmatprep.mubr.f32.mxu0 %v279
        %815 = vmatmul.mubr.f32.gmra.mrb[0].mxu0 %v278
        %v816 = vpop.f32.mrb[0].mxu0
        %v817 = vadd.f32 %v687, %v816
        %v818 = vpop.f32.mrb[0].mxu0
        %819 = vmatprep.mubr.f32.mxu0 %v286
        %820 = vmatmul.mubr.f32.gmra.mrb[0].mxu0 %v285
        %v821 = vpop.f32.mrb[0].mxu0
        %v822 = vadd.f32 %v692, %v821
        %v823 = vpop.f32.mrb[0].mxu0
        %824 = vmatprep.mubr.f32.mxu0 %v293
        %825 = vmatmul.mubr.f32.gmra.mrb[0].mxu0 %v292
        %v826 = vpop.f32.mrb[0].mxu0
        %v827 = vadd.f32 %v697, %v826
        %v828 = vpop.f32.mrb[0].mxu0
        %829 = vdwg.mxu0
        %830 = vmatprep.subr.mxu0 0.0
        %831 = vmatpush1.msra.mxu0 %v391
        %832 = vmatprep.subr.mxu0 0.0
        %833 = vmatpush1.msra.mxu0 %v392
        %834 = vmatprep.subr.mxu0 0.0
        %835 = vmatpush1.msra.mxu0 0.0
        %836 = vmatprep.subr.mxu0 0.0
        %837 = vmatpush1.msra.mxu0 0.0
        %838 = vmatprep.subr.mxu0 0.0
        %839 = vmatpush1.msra.mxu0 0.0
        %840 = vmatprep.subr.mxu0 0.0
        %841 = vmatpush1.msra.mxu0 0.0
        %842 = vmatprep.subr.mxu0 0.0
        %843 = vmatpush1.msra.mxu0 0.0
        %844 = vmatprep.subr.mxu0 0.0
        %845 = vmatpush1.msra.mxu0 0.0
        %846 = vmatprep.subr.mxu0 0.0
        %847 = vmatpush1.msra.mxu0 0.0
        %848 = vmatprep.subr.mxu0 0.0
        %849 = vmatpush1.msra.mxu0 0.0
        %850 = vmatprep.subr.mxu0 0.0
        %851 = vmatpush1.msra.mxu0 0.0
        %852 = vmatprep.subr.mxu0 0.0
        %853 = vmatpush1.msra.mxu0 0.0
        %854 = vmatprep.subr.mxu0 0.0
        %855 = vmatpush1.msra.mxu0 0.0
        %856 = vmatprep.subr.mxu0 0.0
        %857 = vmatpush1.msra.mxu0 0.0
        %858 = vmatprep.subr.mxu0 0.0
        %859 = vmatpush1.msra.mxu0 0.0
        %860 = vmatprep.subr.mxu0 0.0
        %861 = vmatpush1.msra.mxu0 0.0
        %862 = vmatprep.subr.mxu0 0.0
        %863 = vmatpush1.msra.mxu0 0.0
        %864 = vmatprep.subr.mxu0 0.0
        %865 = vmatpush1.msra.mxu0 0.0
        %866 = vmatprep.subr.mxu0 0.0
        %867 = vmatpush1.msra.mxu0 0.0
        %868 = vmatprep.subr.mxu0 0.0
        %869 = vmatpush1.msra.mxu0 0.0
        %870 = vmatprep.subr.mxu0 0.0
        %871 = vmatpush1.msra.mxu0 0.0
        %872 = vmatprep.subr.mxu0 0.0
        %873 = vmatpush1.msra.mxu0 0.0
        %874 = vmatprep.subr.mxu0 0.0
        %875 = vmatpush1.msra.mxu0 0.0
        %876 = vmatprep.subr.mxu0 0.0
        %877 = vmatpush1.msra.mxu0 0.0
        %878 = vmatprep.subr.mxu0 0.0
        %879 = vmatpush1.msra.mxu0 0.0
        %880 = vmatprep.subr.mxu0 0.0
        %881 = vmatpush1.msra.mxu0 0.0
        %882 = vmatprep.subr.mxu0 0.0
        %883 = vmatpush1.msra.mxu0 0.0
        %884 = vmatprep.subr.mxu0 0.0
        %885 = vmatpush1.msra.mxu0 0.0
        %886 = vmatprep.subr.mxu0 0.0
        %887 = vmatpush1.msra.mxu0 0.0
        %888 = vmatprep.subr.mxu0 0.0
        %889 = vmatpush1.msra.mxu0 0.0
        %890 = vmatprep.subr.mxu0 0.0
        %891 = vmatpush1.msra.mxu0 0.0
        %892 = vmatprep.subr.mxu0 0.0
        %893 = vmatpush1.msra.mxu0 0.0
        %894 = vmatprep.mubr.f32.mxu0 0.0
        %895 = vmatmul.mubr.f32.gmra.mrb[0].mxu0 %v402
        %v896 = vpop.f32.mrb[0].mxu0
        %v897 = vadd.f32 %v767, %v896
        %v898 = vpop.f32.mrb[0].mxu0
        %899 = vmatprep.mubr.f32.mxu0 0.0
        %900 = vmatmul.mubr.f32.gmra.mrb[0].mxu0 %v405
        %v901 = vpop.f32.mrb[0].mxu0
        %v902 = vadd.f32 %v772, %v901
        %v903 = vpop.f32.mrb[0].mxu0
        %904 = vmatprep.mubr.f32.mxu0 0.0
        %905 = vmatmul.mubr.f32.gmra.mrb[0].mxu0 %v408
        %v906 = vpop.f32.mrb[0].mxu0
        %v907 = vadd.f32 %v777, %v906
        %v908 = vpop.f32.mrb[0].mxu0
        %909 = vmatprep.mubr.f32.mxu0 0.0
        %910 = vmatmul.mubr.f32.gmra.mrb[0].mxu0 %v411
        %v911 = vpop.f32.mrb[0].mxu0
        %v912 = vadd.f32 %v782, %v911
        %v913 = vpop.f32.mrb[0].mxu0
        %914 = vmatprep.mubr.f32.mxu0 0.0
        %915 = vmatmul.mubr.f32.gmra.mrb[0].mxu0 %v414
        %v916 = vpop.f32.mrb[0].mxu0
        %v917 = vadd.f32 %v787, %v916
        %v918 = vpop.f32.mrb[0].mxu0
        %919 = vmatprep.mubr.f32.mxu0 0.0
        %920 = vmatmul.mubr.f32.gmra.mrb[0].mxu0 %v417
        %v921 = vpop.f32.mrb[0].mxu0
        %v922 = vadd.f32 %v792, %v921
        %v923 = vpop.f32.mrb[0].mxu0
        %924 = vmatprep.mubr.f32.mxu0 0.0
        %925 = vmatmul.mubr.f32.gmra.mrb[0].mxu0 %v420
        %v926 = vpop.f32.mrb[0].mxu0
        %v927 = vadd.f32 %v797, %v926
        %v928 = vpop.f32.mrb[0].mxu0
        %929 = vmatprep.mubr.f32.mxu0 0.0
        %930 = vmatmul.mubr.f32.gmra.mrb[0].mxu0 %v423
        %v931 = vpop.f32.mrb[0].mxu0
        %v932 = vadd.f32 %v802, %v931
        %v933 = vpop.f32.mrb[0].mxu0
        %934 = vmatprep.mubr.f32.mxu0 0.0
        %935 = vmatmul.mubr.f32.gmra.mrb[0].mxu0 %v426
        %v936 = vpop.f32.mrb[0].mxu0
        %v937 = vadd.f32 %v807, %v936
        %v938 = vpop.f32.mrb[0].mxu0
        %939 = vmatprep.mubr.f32.mxu0 0.0
        %940 = vmatmul.mubr.f32.gmra.mrb[0].mxu0 %v429
        %v941 = vpop.f32.mrb[0].mxu0
        %v942 = vadd.f32 %v812, %v941
        %v943 = vpop.f32.mrb[0].mxu0
        %944 = vmatprep.mubr.f32.mxu0 0.0
        %945 = vmatmul.mubr.f32.gmra.mrb[0].mxu0 %v432
        %v946 = vpop.f32.mrb[0].mxu0
        %v947 = vadd.f32 %v817, %v946
        %v948 = vpop.f32.mrb[0].mxu0
        %949 = vmatprep.mubr.f32.mxu0 0.0
        %950 = vmatmul.mubr.f32.gmra.mrb[0].mxu0 %v435
        %v951 = vpop.f32.mrb[0].mxu0
        %v952 = vadd.f32 %v822, %v951
        %v953 = vpop.f32.mrb[0].mxu0
        %954 = vmatprep.mubr.f32.mxu0 0.0
        %955 = vmatmul.mubr.f32.gmra.mrb[0].mxu0 %v438
        %v956 = vpop.f32.mrb[0].mxu0
        %v957 = vadd.f32 %v827, %v956
        %v958 = vpop.f32.mrb[0].mxu0
        %959 = vdwg.mxu0
        %vm960 = vcmask 23552
        %961 = vst.msk [vmem:[%s192] sm:$0xff] %vm960, %v897
        %962 = vst.msk [vmem:[%s192 + $0x8] sm:$0xff] %vm960, %v902
        %963 = vst.msk [vmem:[%s192 + $0x10] sm:$0xff] %vm960, %v907
        %964 = vst.msk [vmem:[%s192 + $0x18] sm:$0xff] %vm960, %v912
        %965 = vst.msk [vmem:[%s192 + $0x20] sm:$0xff] %vm960, %v917
        %966 = vst.msk [vmem:[%s192 + $0x28] sm:$0xff] %vm960, %v922
        %967 = vst.msk [vmem:[%s192 + $0x30] sm:$0xff] %vm960, %v927
        %968 = vst.msk [vmem:[%s192 + $0x38] sm:$0xff] %vm960, %v932
        %969 = vst.msk [vmem:[%s192 + $0x40] sm:$0xff] %vm960, %v937
        %970 = vst.msk [vmem:[%s192 + $0x48] sm:$0xff] %vm960, %v942
        %971 = vst.msk [vmem:[%s192 + $0x50] sm:$0xff] %vm960, %v947
        %972 = vst.msk [vmem:[%s192 + $0x58] sm:$0xff] %vm960, %v952
        %973 = vst.msk [vmem:[%s192 + $0x60] sm:$0xff] %vm960, %v957
        %s974 = sand.u32 %s93, 1
        %s975 = sand.u32 %s93, 1
        %s976 = smul.addr %s975, 104
        %s977 = scalar_lea.vmem [#allocation4], %s976
        // Predicated region
        $region37: #{tpu_custom_call.1} parent=31 // pred_check
          %p978 = pneg %p103
        $region38: #{tpu_custom_call.1} parent=31 // pred_check_branch
          %980 = sbr.rel (%p978) target = $region40
        $region39: #{tpu_custom_call.1} parent=31 // pred_region
          %s981 = smul.u32 13, %s17
          %s982 = ssub.s32 25, %s981
          %p983 = scmp.lt.s32.totalorder %s982, 13
          %s984 = scalar_select %p983, %s982, 13
          %s985 = smul.u32 128, %s984
          %p986 = scmp.ne.s32.totalorder 0, %s985
          %s987 = smul.addr %s981, 8
          %s988 = scalar_lea.vmem %s3, %s987
          // Predicated region
          $region41: #{tpu_custom_call.1} parent=39 // pred_check
            %p989 = pneg %p986
          $region42: #{tpu_custom_call.1} parent=39 // pred_check_branch
            %991 = sbr.rel (%p989) target = $region44
          $region43: #{tpu_custom_call.1} parent=39 // pred_region
            // Predicated region
            $region45: #{tpu_custom_call.1} parent=43 // pred_check
              _
            $region46: #{tpu_custom_call.1} parent=43 // pred_check_branch
              %993 = sbr.rel (0) target = $region48
            $region47: #{tpu_custom_call.1} parent=43 // pred_region
              // Predicated region
              $region67: #{tpu_custom_call.1} parent=47 // pred_check
                _
              $region68: #{tpu_custom_call.1} parent=47 // pred_check_branch
                %1067 = sbr.rel (0) target = $region70
              $region69: #{tpu_custom_call.1} parent=47 // pred_region
                %s1068 = sdiv.u32.pop %s984, 13
                %s1069 = srem.u32.pop %s984, 13
                // While loop
                $region71: #{tpu_custom_call.1} parent=69 // loop_pre_header
                  _
                $region72: #{tpu_custom_call.1} parent=69 // loop_header
                  %s1071 = sphi 0, %s1073
                  %p1072 = scmp.ge.s32.totalorder %s1071, %s1068
                  %s1076 = sphi 0, %s1107
                  %s1077 = sphi %s977, %s1110
                  %s1078 = sphi %s988, %s1111
                $region73: #{tpu_custom_call.1} parent=69 // loop_header_branch
                  %1075 = sbr.rel (%p1072) target = $region77
                $region74: #{tpu_custom_call.1} parent=69 // loop_body
                  %v1079 = vld [vmem:[%s1077] sm:$0xff]
                  %1080 = vst [vmem:[%s1078] sm:$0xff] %v1079
                  %v1081 = vld [vmem:[%s1077 + $0x8] sm:$0xff]
                  %1082 = vst [vmem:[%s1078 + $0x8] sm:$0xff] %v1081
                  %v1083 = vld [vmem:[%s1077 + $0x10] sm:$0xff]
                  %1084 = vst [vmem:[%s1078 + $0x10] sm:$0xff] %v1083
                  %v1085 = vld [vmem:[%s1077 + $0x18] sm:$0xff]
                  %1086 = vst [vmem:[%s1078 + $0x18] sm:$0xff] %v1085
                  %v1087 = vld [vmem:[%s1077 + $0x20] sm:$0xff]
                  %1088 = vst [vmem:[%s1078 + $0x20] sm:$0xff] %v1087
                  %v1089 = vld [vmem:[%s1077 + $0x28] sm:$0xff]
                  %1090 = vst [vmem:[%s1078 + $0x28] sm:$0xff] %v1089
                  %v1091 = vld [vmem:[%s1077 + $0x30] sm:$0xff]
                  %1092 = vst [vmem:[%s1078 + $0x30] sm:$0xff] %v1091
                  %v1093 = vld [vmem:[%s1077 + $0x38] sm:$0xff]
                  %1094 = vst [vmem:[%s1078 + $0x38] sm:$0xff] %v1093
                  %v1095 = vld [vmem:[%s1077 + $0x40] sm:$0xff]
                  %1096 = vst [vmem:[%s1078 + $0x40] sm:$0xff] %v1095
                  %v1097 = vld [vmem:[%s1077 + $0x48] sm:$0xff]
                  %1098 = vst [vmem:[%s1078 + $0x48] sm:$0xff] %v1097
                  %v1099 = vld [vmem:[%s1077 + $0x50] sm:$0xff]
                  %1100 = vst [vmem:[%s1078 + $0x50] sm:$0xff] %v1099
                  %v1101 = vld [vmem:[%s1077 + $0x58] sm:$0xff]
                  %1102 = vst [vmem:[%s1078 + $0x58] sm:$0xff] %v1101
                  %v1103 = vld [vmem:[%s1077 + $0x60] sm:$0xff]
                  %1104 = vst [vmem:[%s1078 + $0x60] sm:$0xff] %v1103
                  %s1105 = sadd.s32 1, %s1076
                  %p1106 = scmp.ge.s32.totalorder %s1105, %s1068
                  %s1107 = scalar_select %p1106, 0, %s1105
                  %s1108 = smul.u32 %s1107, 104
                  %s1109 = smul.u32 %s1107, 104
                  %s1110 = scalar_lea.vmem %s977, %s1108 [#allocation4]
                  %s1111 = scalar_lea.vmem %s988, %s1109
                $region75: #{tpu_custom_call.1} parent=69 // loop_footer
                  %s1073 = sadd.s32 %s1071, 1
                $region76: #{tpu_custom_call.1} parent=69 // loop_footer_branch
                  %1070 = sbr.rel target = $region72
                $region77: #{tpu_custom_call.1} parent=69 // loop_exit
                  _
                %s1112 = sdiv.u32.pop %s984, 13
                %s1113 = srem.u32.pop %s984, 13
                %s1114 = smul.u32 %s1112, 13
                %s1115 = smul.u32 8, %s1114
                %s1116 = scalar_lea.vmem %s977, %s1115 [#allocation4]
                %s1117 = smul.u32 8, %s1114
                %s1118 = scalar_lea.vmem %s988, %s1117
                // While loop
                $region78: #{tpu_custom_call.1} parent=69 // loop_pre_header
                  _
                $region79: #{tpu_custom_call.1} parent=69 // loop_header
                  %s1120 = sphi 0, %s1122
                  %p1121 = scmp.ge.s32.totalorder %s1120, %s1113
                  %s1125 = sphi 0, %s1132
                  %s1126 = sphi %s1116, %s1135
                  %s1127 = sphi %s1118, %s1136
                $region80: #{tpu_custom_call.1} parent=69 // loop_header_branch
                  %1124 = sbr.rel (%p1121) target = $region84
                $region81: #{tpu_custom_call.1} parent=69 // loop_body
                  %v1128 = vld [vmem:[%s1126] sm:$0xff]
                  %1129 = vst [vmem:[%s1127] sm:$0xff] %v1128
                  %s1130 = sadd.s32 1, %s1125
                  %p1131 = scmp.ge.s32.totalorder %s1130, %s1113
                  %s1132 = scalar_select %p1131, 0, %s1130
                  %s1133 = smul.u32 %s1132, 8
                  %s1134 = smul.u32 %s1132, 8
                  %s1135 = scalar_lea.vmem %s1116, %s1133 [#allocation4]
                  %s1136 = scalar_lea.vmem %s1118, %s1134
                $region82: #{tpu_custom_call.1} parent=69 // loop_footer
                  %s1122 = sadd.s32 %s1120, 1
                $region83: #{tpu_custom_call.1} parent=69 // loop_footer_branch
                  %1119 = sbr.rel target = $region79
                $region84: #{tpu_custom_call.1} parent=69 // loop_exit
                  _
              $region70: #{tpu_custom_call.1} parent=47 // pred_fallthru
                _
              // Predicated region
              $region85: #{tpu_custom_call.1} parent=47 // pred_check
                _
              $region86: #{tpu_custom_call.1} parent=47 // pred_check_branch
                %1138 = sbr.rel target = $region88
              $region87: #{tpu_custom_call.1} parent=47 // pred_region
                _
              $region88: #{tpu_custom_call.1} parent=47 // pred_fallthru
                _
            $region48: #{tpu_custom_call.1} parent=43 // pred_fallthru
              _
            // Predicated region
            $region49: #{tpu_custom_call.1} parent=43 // pred_check
              _
            $region50: #{tpu_custom_call.1} parent=43 // pred_check_branch
              %995 = sbr.rel target = $region52
            $region51: #{tpu_custom_call.1} parent=43 // pred_region
              %s997 = sdiv.u32.pop %s984, 13
              %s998 = srem.u32.pop %s984, 13
              // While loop
              $region53: #{tpu_custom_call.1} parent=51 // loop_pre_header
                _
              $region54: #{tpu_custom_call.1} parent=51 // loop_header
                %s1000 = sphi 0, %s1002
                %p1001 = scmp.ge.s32.totalorder %s1000, %s997
                %s1005 = sphi 0, %s1036
                %s1006 = sphi %s977, %s1039
                %s1007 = sphi %s988, %s1040
              $region55: #{tpu_custom_call.1} parent=51 // loop_header_branch
                %1004 = sbr.rel (%p1001) target = $region59
              $region56: #{tpu_custom_call.1} parent=51 // loop_body
                %v1008 = vld [vmem:[%s1006] sm:$0xff]
                %1009 = vst [vmem:[%s1007] sm:$0xff] %v1008
                %v1010 = vld [vmem:[%s1006 + $0x8] sm:$0xff]
                %1011 = vst [vmem:[%s1007 + $0x8] sm:$0xff] %v1010
                %v1012 = vld [vmem:[%s1006 + $0x10] sm:$0xff]
                %1013 = vst [vmem:[%s1007 + $0x10] sm:$0xff] %v1012
                %v1014 = vld [vmem:[%s1006 + $0x18] sm:$0xff]
                %1015 = vst [vmem:[%s1007 + $0x18] sm:$0xff] %v1014
                %v1016 = vld [vmem:[%s1006 + $0x20] sm:$0xff]
                %1017 = vst [vmem:[%s1007 + $0x20] sm:$0xff] %v1016
                %v1018 = vld [vmem:[%s1006 + $0x28] sm:$0xff]
                %1019 = vst [vmem:[%s1007 + $0x28] sm:$0xff] %v1018
                %v1020 = vld [vmem:[%s1006 + $0x30] sm:$0xff]
                %1021 = vst [vmem:[%s1007 + $0x30] sm:$0xff] %v1020
                %v1022 = vld [vmem:[%s1006 + $0x38] sm:$0xff]
                %1023 = vst [vmem:[%s1007 + $0x38] sm:$0xff] %v1022
                %v1024 = vld [vmem:[%s1006 + $0x40] sm:$0xff]
                %1025 = vst [vmem:[%s1007 + $0x40] sm:$0xff] %v1024
                %v1026 = vld [vmem:[%s1006 + $0x48] sm:$0xff]
                %1027 = vst [vmem:[%s1007 + $0x48] sm:$0xff] %v1026
                %v1028 = vld [vmem:[%s1006 + $0x50] sm:$0xff]
                %1029 = vst [vmem:[%s1007 + $0x50] sm:$0xff] %v1028
                %v1030 = vld [vmem:[%s1006 + $0x58] sm:$0xff]
                %1031 = vst [vmem:[%s1007 + $0x58] sm:$0xff] %v1030
                %v1032 = vld [vmem:[%s1006 + $0x60] sm:$0xff]
                %1033 = vst [vmem:[%s1007 + $0x60] sm:$0xff] %v1032
                %s1034 = sadd.s32 1, %s1005
                %p1035 = scmp.ge.s32.totalorder %s1034, %s997
                %s1036 = scalar_select %p1035, 0, %s1034
                %s1037 = smul.u32 %s1036, 104
                %s1038 = smul.u32 %s1036, 104
                %s1039 = scalar_lea.vmem %s977, %s1037 [#allocation4]
                %s1040 = scalar_lea.vmem %s988, %s1038
              $region57: #{tpu_custom_call.1} parent=51 // loop_footer
                %s1002 = sadd.s32 %s1000, 1
              $region58: #{tpu_custom_call.1} parent=51 // loop_footer_branch
                %999 = sbr.rel target = $region54
              $region59: #{tpu_custom_call.1} parent=51 // loop_exit
                _
              %s1041 = sdiv.u32.pop %s984, 13
              %s1042 = srem.u32.pop %s984, 13
              %s1043 = smul.u32 %s1041, 13
              %s1044 = smul.u32 8, %s1043
              %s1045 = scalar_lea.vmem %s977, %s1044 [#allocation4]
              %s1046 = smul.u32 8, %s1043
              %s1047 = scalar_lea.vmem %s988, %s1046
              // While loop
              $region60: #{tpu_custom_call.1} parent=51 // loop_pre_header
                _
              $region61: #{tpu_custom_call.1} parent=51 // loop_header
                %s1049 = sphi 0, %s1051
                %p1050 = scmp.ge.s32.totalorder %s1049, %s1042
                %s1054 = sphi 0, %s1061
                %s1055 = sphi %s1045, %s1064
                %s1056 = sphi %s1047, %s1065
              $region62: #{tpu_custom_call.1} parent=51 // loop_header_branch
                %1053 = sbr.rel (%p1050) target = $region66
              $region63: #{tpu_custom_call.1} parent=51 // loop_body
                %v1057 = vld [vmem:[%s1055] sm:$0xff]
                %1058 = vst [vmem:[%s1056] sm:$0xff] %v1057
                %s1059 = sadd.s32 1, %s1054
                %p1060 = scmp.ge.s32.totalorder %s1059, %s1042
                %s1061 = scalar_select %p1060, 0, %s1059
                %s1062 = smul.u32 %s1061, 8
                %s1063 = smul.u32 %s1061, 8
                %s1064 = scalar_lea.vmem %s1045, %s1062 [#allocation4]
                %s1065 = scalar_lea.vmem %s1047, %s1063
              $region64: #{tpu_custom_call.1} parent=51 // loop_footer
                %s1051 = sadd.s32 %s1049, 1
              $region65: #{tpu_custom_call.1} parent=51 // loop_footer_branch
                %1048 = sbr.rel target = $region61
              $region66: #{tpu_custom_call.1} parent=51 // loop_exit
                _
            $region52: #{tpu_custom_call.1} parent=43 // pred_fallthru
              _
          $region44: #{tpu_custom_call.1} parent=39 // pred_fallthru
            _
          %1139 = vnop
        $region40: #{tpu_custom_call.1} parent=31 // pred_fallthru
          _
      $region32: #{tpu_custom_call.1} parent=5 // pred_fallthru
        _
      %p1140 = scmp.le.s32.totalorder 2, %s12
      // Predicated region
      $region89: #{tpu_custom_call.1} parent=5 // pred_check
        %p1141 = pneg %p1140
      $region90: #{tpu_custom_call.1} parent=5 // pred_check_branch
        %1143 = sbr.rel (%p1141) target = $region92
      $region91: #{tpu_custom_call.1} parent=5 // pred_region
        %s1144 = ssub.s32 %s12, 2
        // Predicated region
        $region93: #{tpu_custom_call.1} parent=91 // pred_check
          %p1145 = pneg %p109
        $region94: #{tpu_custom_call.1} parent=91 // pred_check_branch
          %1147 = sbr.rel (%p1145) target = $region96
        $region95: #{tpu_custom_call.1} parent=91 // pred_region
          %s1148 = sand.u32 %s94, 1
          %s1149 = sand.u32 %s94, 1
          %s1150 = smul.addr %s1149, 104
          %s1151 = scalar_lea.vmem [#allocation4], %s1150
        $region96: #{tpu_custom_call.1} parent=91 // pred_fallthru
          _
      $region92: #{tpu_custom_call.1} parent=5 // pred_fallthru
        _
    $region6: #{tpu_custom_call.1} parent=1 // loop_footer
      %s16 = sadd.s32 1, %s12
    $region7: #{tpu_custom_call.1} parent=1 // loop_footer_branch
      %11 = sbr.rel target = $region3
    $region8: #{tpu_custom_call.1} parent=1 // loop_exit
      _
    %1152 = vsyncpa [#allocation3], 1
    %s1153 = scalar_lea.sflag [#allocation3], 1
    %1154 = vsyncpa %s1153, 1

</llo_original>
